<compile_context>
chip_gen: v5e
topology: v5e:2x2
jax: 0.10.0
libtpu: 0.0.40
codegen_flags: <defaults>
</compile_context>

<pallas_src>
import functools

import jax
import jax.numpy as jnp
from jax.experimental import pallas as pl
from jax.experimental.pallas import tpu as pltpu


_VMEM_WORKSET_BUDGET = 28 * 1024 * 1024   # tile-sizing budget (safe on v7x: 64 MiB/TC)
_DEFAULT_VMEM_LIMIT = 48 * 1024 * 1024    # raised scoped-VMEM limit (defaults are 16/32 MiB)


def _default_num_cores():
    """2 on megacore chips (v4/v5p/v7x share the 'parallel' axis across 2 TCs),
    1 on single-TC chips (v5e/v6e) where the split is pure bookkeeping."""
    try:
        kind = jax.devices()[0].device_kind.lower()
    except Exception:
        return 1
    if any(tag in kind for tag in ("v7", "v5p", "v4")):
        return 2
    return 1


def _choose_block_b(b, c, in_bytes, block_b=None, n_buf=2):
    """Largest B tile whose in-kernel working set fits the VMEM budget:
    ~n_buf*tb*C*in_bytes pipelined input + ~4*tb*C*4 f32/i32 temporaries
    (upcast, exp, iota, select) + tb*128*4*3 bin temps + 2*tb*512 lane-padded
    labels buffers."""
    if block_b is None:
        per_row = c * (n_buf * in_bytes + 16) + 2560
        tb = int(_VMEM_WORKSET_BUDGET // per_row)
    else:
        tb = int(block_b)
    tb = max(16, min(tb, 8192))
    tb = (tb // 16) * 16
    if b <= 8:
        return b                         # block == full array dim (always legal)
    return max(8, min(tb, (b // 8) * 8))  # multiple of 8, never larger than needed


def _soft_ece_partial_kernel(logits_ref, labels_ref, out_ref, acc_ref, *,
                             n_bins, sigma, eps, valid_b, steps_per_core):
    core = pl.program_id(0)
    step = pl.program_id(1)
    n_steps = pl.num_programs(1)

    # Zero this core's per-bin accumulator at the start of its B-sweep.
    @pl.when(step == 0)
    def _():
        acc_ref[...] = jnp.zeros_like(acc_ref)

    logits = logits_ref[...].astype(jnp.float32)     # (TB, C) - f32 upcast on VPU
    labels = labels_ref[...]                         # (TB, 1) int32
    tb, c = logits.shape

    # Row-validity mask: the last tile (and any core-rounding overshoot tile,
    # whose index_map was clamped to the last tile) holds garbage rows.
    # Sanitize BEFORE max/exp so NaN/Inf garbage can't poison sums via NaN*0.
    tile_id = core * steps_per_core + step
    row = tile_id * tb + jax.lax.broadcasted_iota(jnp.int32, (tb, 1), 0)
    valid = row < valid_b                            # (TB, 1) bool
    logits = jnp.where(valid, logits, 0.0)

    # Softmax confidence: max prob == 1 / sum(exp(logits - max)).
    max_l = jnp.max(logits, axis=1, keepdims=True)                    # (TB, 1)
    denom = jnp.sum(jnp.exp(logits - max_l), axis=1, keepdims=True)   # (TB, 1)
    conf = pl.reciprocal(denom)   # exact: narrow Gaussian amplifies conf error ~200x

    # First-occurrence argmax (matches torch.max tie-breaking).
    col = jax.lax.broadcasted_iota(jnp.int32, (tb, c), 1)
    pred = jnp.min(jnp.where(logits == max_l, col, c), axis=1, keepdims=True)
    acc = (pred == labels).astype(jnp.float32)                        # (TB, 1)

    # Gaussian soft binning over a lane-dense 128-wide bin axis; centers are
    # generated in-kernel, lanes >= n_bins masked to zero weight.
    lane = jax.lax.broadcasted_iota(jnp.int32, (1, 128), 1)
    centers = (lane.astype(jnp.float32) + 0.5) * (1.0 / n_bins)       # (1, 128)
    diff = conf - centers                                             # (TB, 128)
    w = jnp.exp((-0.5 / (sigma * sigma)) * (diff * diff))
    w = jnp.where(lane < n_bins, w, 0.0)
    w_sum = jnp.sum(w, axis=1, keepdims=True) + eps                   # (TB, 1)
    # Fold 1/w_sum and validity into one per-row scale; approx recip is fine
    # here (~1e-3 rel, intentional) - w_norm is never materialized.
    scale = pl.reciprocal(w_sum, approx=True) * valid.astype(jnp.float32)
    wn = w * scale                                                    # (TB, 128)

    # Accumulate per-bin partial sums in the lane-dense scratch.
    acc_ref[0:1, :] += jnp.sum(wn * conf, axis=0, keepdims=True)   # sum_conf_in_bin
    acc_ref[1:2, :] += jnp.sum(wn, axis=0, keepdims=True)          # sum_weights_in_bin
    acc_ref[2:3, :] += jnp.sum(wn * acc, axis=0, keepdims=True)    # sum_acc_in_bin

    # Single lane-dense writeback per core sweep.
    @pl.when(step == n_steps - 1)
    def _():
        out_ref[...] = acc_ref[...].reshape(1, 8, 128)


def soft_ece_pallas(logits, labels, n_bins=15, sigma=0.05, eps=1e-6,
                    block_b=None, num_cores=None, vmem_limit_bytes=None,
                    logits_buffers=None):
    """logits: (B, C) float (any dtype, read natively), labels: (B,) int -> f32 scalar."""
    b, c = logits.shape
    assert n_bins <= 128, "n_bins > 128 needs a chunked bin axis"  # TODO(synk)
    labels2d = labels.astype(jnp.int32).reshape(b, 1)

    in_bytes = jnp.dtype(logits.dtype).itemsize
    n_buf = 2 if logits_buffers is None else int(logits_buffers)
    tb = _choose_block_b(b, c, in_bytes, block_b, n_buf)
    total_tiles = pl.cdiv(b, tb)

    if num_cores is None:
        num_cores = _default_num_cores()
    if total_tiles < num_cores:
        num_cores = 1
    steps = pl.cdiv(total_tiles, num_cores)
    last_tile = total_tiles - 1

    if vmem_limit_bytes is None:
        vmem_limit_bytes = _DEFAULT_VMEM_LIMIT

    kernel = functools.partial(
        _soft_ece_partial_kernel, n_bins=int(n_bins), sigma=float(sigma),
        eps=float(eps), valid_b=int(b), steps_per_core=int(steps))

    def tile_map(ci, si):
        # Clamp: core-rounding overshoot grid points re-read the last tile;
        # their row indices are >= B so the in-kernel mask zeroes them.
        return (jnp.minimum(ci * steps + si, last_tile), 0)

    logits_spec_kwargs = {}
    if logits_buffers is not None:   # e.g. pl.Buffered(3) on v7x to hide DMA
        logits_spec_kwargs["pipeline_mode"] = pl.Buffered(int(logits_buffers))

    partials = pl.pallas_call(
        kernel,
        out_shape=jax.ShapeDtypeStruct((num_cores, 8, 128), jnp.float32),
        grid_spec=pltpu.PrefetchScalarGridSpec(
            num_scalar_prefetch=0,
            grid=(num_cores, steps),
            in_specs=[
                # logits stream, native dtype (bf16 halves HBM traffic)
                pl.BlockSpec((tb, c), tile_map, **logits_spec_kwargs),
                # labels stream (lane-sparse block; accounted in the tile budget)
                pl.BlockSpec((tb, 1), tile_map),
            ],
            out_specs=pl.BlockSpec((1, 8, 128), lambda ci, si: (ci, 0, 0)),
            scratch_shapes=[pltpu.VMEM((8, 128), jnp.float32)],
        ),
        compiler_params=pltpu.CompilerParams(
            dimension_semantics=("parallel", "arbitrary"),
            vmem_limit_bytes=int(vmem_limit_bytes)),
    )(logits, labels2d)

    # Tiny finalize in plain JAX: combine per-core partial sums.
    p = jnp.sum(partials, axis=0)                  # (8, 128)
    sum_conf = p[0, :n_bins]
    sum_w = p[1, :n_bins]
    sum_acc = p[2, :n_bins]
    avg_conf = sum_conf / (sum_w + eps)
    avg_acc = sum_acc / (sum_w + eps)
    prop = sum_w / b
    return jnp.sum(jnp.abs(avg_conf - avg_acc) * prop)


def soft_ece_ref(logits, labels, n_bins=15, sigma=0.05, eps=1e-6):
    """Pure-JAX reference mirroring the PyTorch module."""
    bin_centers = jnp.linspace(1.0 / (2 * n_bins), 1.0 - 1.0 / (2 * n_bins), n_bins)
    probs = jax.nn.softmax(logits.astype(jnp.float32), axis=1)
    conf = jnp.max(probs, axis=1)
    pred = jnp.argmax(probs, axis=1)
    acc = (pred == labels).astype(jnp.float32)
    diff = conf[:, None] - bin_centers[None, :]
    w = jnp.exp(-0.5 * diff ** 2 / sigma ** 2)
    w_norm = w / (jnp.sum(w, axis=1, keepdims=True) + eps)
    sum_conf = jnp.sum(w_norm * conf[:, None], axis=0)
    sum_w = jnp.sum(w_norm, axis=0)
    avg_conf = sum_conf / (sum_w + eps)
    sum_acc = jnp.sum(w_norm * acc[:, None], axis=0)
    avg_acc = sum_acc / (sum_w + eps)
    prop = sum_w / conf.shape[0]
    return jnp.sum(jnp.abs(avg_conf - avg_acc) * prop)


if __name__ == "__main__":
    key = jax.random.PRNGKey(0)
    k1, k2, k3, k4 = jax.random.split(key, 4)

    # Small exact-fit case.
    B, C = 8, 16
    logits = jax.random.normal(k1, (B, C), jnp.float32) * 2.0
    labels = jax.random.randint(k2, (B,), 0, C, dtype=jnp.int32)
    out = jax.block_until_ready(soft_ece_pallas(logits, labels))
    ref = jax.block_until_ready(soft_ece_ref(logits, labels))
    assert jnp.allclose(out, ref, atol=1e-3, rtol=1e-3), (out, ref)

    # Ragged case: exercises the cdiv grid + in-kernel row masking (no wrapper pad).
    B2, C2 = 37, 50
    logits2 = jax.random.normal(k3, (B2, C2), jnp.float32) * 3.0
    labels2 = jax.random.randint(k4, (B2,), 0, C2, dtype=jnp.int32)
    out2 = jax.block_until_ready(soft_ece_pallas(logits2, labels2))
    ref2 = jax.block_until_ready(soft_ece_ref(logits2, labels2))
    assert jnp.allclose(out2, ref2, atol=1e-3, rtol=1e-3), (out2, ref2)

    # Native-dtype (bf16) streaming path.
    out3 = jax.block_until_ready(soft_ece_pallas(logits2.astype(jnp.bfloat16), labels2))
    ref3 = jax.block_until_ready(soft_ece_ref(logits2.astype(jnp.bfloat16), labels2))
    assert jnp.allclose(out3, ref3, atol=5e-3, rtol=5e-3), (out3, ref3)

    print("KERNEL_OK")
</pallas_src>

<mosaic_0001>
module attributes {stable_mosaic.version = 11 : i64} {
  func.func @_soft_ece_partial_kernel(%arg0: i32, %arg1: i32, %arg2: memref<8x16xf32, #tpu.memory_space<vmem>>, %arg3: memref<8x1xi32, #tpu.memory_space<vmem>>, %arg4: memref<1x8x128xf32, #tpu.memory_space<vmem>>, %arg5: memref<8x128xf32, #tpu.memory_space<vmem>>) attributes {dimension_semantics = [#tpu.dimension_semantics<parallel>, #tpu.dimension_semantics<arbitrary>], iteration_bounds = array<i64: 1, 1>, scalar_prefetch = 0 : i64, scratch_operands = 1 : i64, tpu.core_type = #tpu.core_type<tc>, window_params = [{transform_indices = @transform_0, window_bounds = array<i64: 8, 16>}, {transform_indices = @transform_1, window_bounds = array<i64: 8, 1>}, {transform_indices = @transform_2, window_bounds = array<i64: 1, 8, 128>}]} {
    %c0_i32 = arith.constant 0 : i32
    %0 = arith.cmpi eq, %arg1, %c0_i32 : i32
    %1 = arith.extui %0 : i1 to i32
    %c0_i32_0 = arith.constant 0 : i32
    %2 = arith.cmpi ne, %1, %c0_i32_0 : i32
    scf.if %2 {
      %cst_29 = arith.constant 0.000000e+00 : f32
      %86 = vector.broadcast %cst_29 : f32 to vector<8x128xf32>
      %c0_30 = arith.constant 0 : index
      %c0_31 = arith.constant 0 : index
      %87 = vector.load %arg5[%c0_30, %c0_31] : memref<8x128xf32, #tpu.memory_space<vmem>>, vector<8x128xf32>
      tpu.vector_store %arg5[%c0_30, %c0_31], %86 {strides = array<i32>} : memref<8x128xf32, #tpu.memory_space<vmem>>, vector<8x128xf32>,
    } else {
    }
    %c0 = arith.constant 0 : index
    %c0_1 = arith.constant 0 : index
    %3 = vector.load %arg2[%c0, %c0_1] : memref<8x16xf32, #tpu.memory_space<vmem>>, vector<8x16xf32>
    %c0_2 = arith.constant 0 : index
    %c0_3 = arith.constant 0 : index
    %4 = vector.load %arg3[%c0_2, %c0_3] : memref<8x1xi32, #tpu.memory_space<vmem>>, vector<8x1xi32>
    %c1_i32 = arith.constant 1 : i32
    %5 = arith.muli %arg0, %c1_i32 : i32
    %6 = arith.addi %5, %arg1 : i32
    %c8_i32 = arith.constant 8 : i32
    %7 = arith.muli %6, %c8_i32 : i32
    %8 = tpu.iota {dimensions = array<i32: 0>} : vector<8x1xi32>
    %9 = vector.broadcast %7 : i32 to vector<8x1xi32>
    %10 = arith.addi %9, %8 : vector<8x1xi32>
    %c8_i32_4 = arith.constant 8 : i32
    %11 = vector.broadcast %c8_i32_4 : i32 to vector<8x1xi32>
    %12 = arith.cmpi slt, %10, %11 : vector<8x1xi32>
    %cst = arith.constant 0.000000e+00 : f32
    %13 = vector.shape_cast %12 : vector<8x1xi1> to vector<8x1xi1>
    %14 = vector.broadcast %13 : vector<8x1xi1> to vector<8x16xi1>
    %15 = vector.broadcast %cst : f32 to vector<8x16xf32>
    %16 = arith.select %14, %3, %15 : vector<8x16xi1>, vector<8x16xf32>
    %cst_5 = arith.constant dense<0xFF800000> : vector<8xf32>
    %17 = vector.multi_reduction <maximumf>, %16, %cst_5 [1] : vector<8x16xf32> to vector<8xf32>
    %18 = vector.shape_cast %17 : vector<8xf32> to vector<8x1xf32>
    %19 = vector.broadcast %18 : vector<8x1xf32> to vector<8x16xf32>
    %20 = arith.subf %16, %19 : vector<8x16xf32>
    %21 = math.exp %20 : vector<8x16xf32>
    %cst_6 = arith.constant dense<0.000000e+00> : vector<8xf32>
    %22 = vector.multi_reduction <add>, %21, %cst_6 [1] : vector<8x16xf32> to vector<8xf32>
    %23 = vector.shape_cast %22 : vector<8xf32> to vector<8x1xf32>
    %24 = tpu.reciprocal %23 : vector<8x1xf32> -> vector<8x1xf32>
    %25 = tpu.iota {dimensions = array<i32: 1>} : vector<8x16xi32>
    %26 = vector.broadcast %18 : vector<8x1xf32> to vector<8x16xf32>
    %27 = arith.cmpf oeq, %16, %26 : vector<8x16xf32>
    %c16_i32 = arith.constant 16 : i32
    %28 = vector.broadcast %c16_i32 : i32 to vector<8x16xi32>
    %29 = arith.select %27, %25, %28 : vector<8x16xi1>, vector<8x16xi32>
    %cst_7 = arith.constant dense<2147483647> : vector<8xi32>
    %30 = vector.multi_reduction <minsi>, %29, %cst_7 [1] : vector<8x16xi32> to vector<8xi32>
    %31 = vector.shape_cast %30 : vector<8xi32> to vector<8x1xi32>
    %32 = arith.cmpi eq, %31, %4 : vector<8x1xi32>
    %33 = arith.extui %32 : vector<8x1xi1> to vector<8x1xi32>
    %34 = arith.sitofp %33 : vector<8x1xi32> to vector<8x1xf32>
    %35 = tpu.iota {dimensions = array<i32: 1>} : vector<1x128xi32>
    %36 = arith.sitofp %35 : vector<1x128xi32> to vector<1x128xf32>
    %cst_8 = arith.constant 5.000000e-01 : f32
    %37 = vector.broadcast %cst_8 : f32 to vector<1x128xf32>
    %38 = arith.addf %36, %37 : vector<1x128xf32>
    %cst_9 = arith.constant 0.0666666701 : f32
    %39 = vector.broadcast %cst_9 : f32 to vector<1x128xf32>
    %40 = arith.mulf %38, %39 : vector<1x128xf32>
    %41 = vector.broadcast %24 : vector<8x1xf32> to vector<8x128xf32>
    %42 = vector.broadcast %40 : vector<1x128xf32> to vector<8x128xf32>
    %43 = arith.subf %41, %42 : vector<8x128xf32>
    %44 = arith.mulf %43, %43 : vector<8x128xf32>
    %cst_10 = arith.constant -2.000000e+02 : f32
    %45 = vector.broadcast %cst_10 : f32 to vector<8x128xf32>
    %46 = arith.mulf %45, %44 : vector<8x128xf32>
    %47 = math.exp %46 : vector<8x128xf32>
    %c15_i32 = arith.constant 15 : i32
    %48 = vector.broadcast %c15_i32 : i32 to vector<1x128xi32>
    %49 = arith.cmpi slt, %35, %48 : vector<1x128xi32>
    %cst_11 = arith.constant 0.000000e+00 : f32
    %50 = vector.shape_cast %49 : vector<1x128xi1> to vector<1x128xi1>
    %51 = vector.broadcast %50 : vector<1x128xi1> to vector<8x128xi1>
    %52 = vector.broadcast %cst_11 : f32 to vector<8x128xf32>
    %53 = arith.select %51, %47, %52 : vector<8x128xi1>, vector<8x128xf32>
    %cst_12 = arith.constant dense<0.000000e+00> : vector<8xf32>
    %54 = vector.multi_reduction <add>, %53, %cst_12 [1] : vector<8x128xf32> to vector<8xf32>
    %55 = vector.shape_cast %54 : vector<8xf32> to vector<8x1xf32>
    %cst_13 = arith.constant 9.99999997E-7 : f32
    %56 = vector.broadcast %cst_13 : f32 to vector<8x1xf32>
    %57 = arith.addf %55, %56 : vector<8x1xf32>
    %58 = tpu.reciprocal %57 {approx = true} : vector<8x1xf32> -> vector<8x1xf32>
    %59 = arith.extui %12 : vector<8x1xi1> to vector<8x1xi32>
    %60 = arith.sitofp %59 : vector<8x1xi32> to vector<8x1xf32>
    %61 = arith.mulf %58, %60 : vector<8x1xf32>
    %62 = vector.broadcast %61 : vector<8x1xf32> to vector<8x128xf32>
    %63 = arith.mulf %53, %62 : vector<8x128xf32>
    %c0_14 = arith.constant 0 : index
    %c0_15 = arith.constant 0 : index
    %64 = vector.load %arg5[%c0_14, %c0_15] : memref<8x128xf32, #tpu.memory_space<vmem>>, vector<1x128xf32>
    %65 = vector.broadcast %24 : vector<8x1xf32> to vector<8x128xf32>
    %66 = arith.mulf %63, %65 : vector<8x128xf32>
    %cst_16 = arith.constant dense<0.000000e+00> : vector<128xf32>
    %67 = vector.multi_reduction <add>, %66, %cst_16 [0] : vector<8x128xf32> to vector<128xf32>
    %68 = vector.shape_cast %67 : vector<128xf32> to vector<1x128xf32>
    %69 = arith.addf %64, %68 : vector<1x128xf32>
    %c0_17 = arith.constant 0 : index
    %c0_18 = arith.constant 0 : index
    %70 = vector.load %arg5[%c0_17, %c0_18] : memref<8x128xf32, #tpu.memory_space<vmem>>, vector<1x128xf32>
    tpu.vector_store %arg5[%c0_17, %c0_18], %69 {strides = array<i32>} : memref<8x128xf32, #tpu.memory_space<vmem>>, vector<1x128xf32>,
    %c1 = arith.constant 1 : index
    %c0_19 = arith.constant 0 : index
    %71 = vector.load %arg5[%c1, %c0_19] : memref<8x128xf32, #tpu.memory_space<vmem>>, vector<1x128xf32>
    %cst_20 = arith.constant dense<0.000000e+00> : vector<128xf32>
    %72 = vector.multi_reduction <add>, %63, %cst_20 [0] : vector<8x128xf32> to vector<128xf32>
    %73 = vector.shape_cast %72 : vector<128xf32> to vector<1x128xf32>
    %74 = arith.addf %71, %73 : vector<1x128xf32>
    %c1_21 = arith.constant 1 : index
    %c0_22 = arith.constant 0 : index
    %75 = vector.load %arg5[%c1_21, %c0_22] : memref<8x128xf32, #tpu.memory_space<vmem>>, vector<1x128xf32>
    tpu.vector_store %arg5[%c1_21, %c0_22], %74 {strides = array<i32>} : memref<8x128xf32, #tpu.memory_space<vmem>>, vector<1x128xf32>,
    %c2 = arith.constant 2 : index
    %c0_23 = arith.constant 0 : index
    %76 = vector.load %arg5[%c2, %c0_23] : memref<8x128xf32, #tpu.memory_space<vmem>>, vector<1x128xf32>
    %77 = vector.broadcast %34 : vector<8x1xf32> to vector<8x128xf32>
    %78 = arith.mulf %63, %77 : vector<8x128xf32>
    %cst_24 = arith.constant dense<0.000000e+00> : vector<128xf32>
    %79 = vector.multi_reduction <add>, %78, %cst_24 [0] : vector<8x128xf32> to vector<128xf32>
    %80 = vector.shape_cast %79 : vector<128xf32> to vector<1x128xf32>
    %81 = arith.addf %76, %80 : vector<1x128xf32>
    %c2_25 = arith.constant 2 : index
    %c0_26 = arith.constant 0 : index
    %82 = vector.load %arg5[%c2_25, %c0_26] : memref<8x128xf32, #tpu.memory_space<vmem>>, vector<1x128xf32>
    tpu.vector_store %arg5[%c2_25, %c0_26], %81 {strides = array<i32>} : memref<8x128xf32, #tpu.memory_space<vmem>>, vector<1x128xf32>,
    %c0_i32_27 = arith.constant 0 : i32
    %83 = arith.cmpi eq, %arg1, %c0_i32_27 : i32
    %84 = arith.extui %83 : i1 to i32
    %c0_i32_28 = arith.constant 0 : i32
    %85 = arith.cmpi ne, %84, %c0_i32_28 : i32
    scf.if %85 {
      %c0_29 = arith.constant 0 : index
      %c0_30 = arith.constant 0 : index
      %86 = vector.load %arg5[%c0_29, %c0_30] : memref<8x128xf32, #tpu.memory_space<vmem>>, vector<8x128xf32>
      %87 = vector.shape_cast %86 : vector<8x128xf32> to vector<1x8x128xf32>
      %c0_31 = arith.constant 0 : index
      %c0_32 = arith.constant 0 : index
      %c0_33 = arith.constant 0 : index
      %88 = vector.load %arg4[%c0_31, %c0_32, %c0_33] : memref<1x8x128xf32, #tpu.memory_space<vmem>>, vector<1x8x128xf32>
      tpu.vector_store %arg4[%c0_31, %c0_32, %c0_33], %87 {strides = array<i32>} : memref<1x8x128xf32, #tpu.memory_space<vmem>>, vector<1x8x128xf32>,
    } else {
    }
    return
  }
  func.func @transform_0(%arg0: i32, %arg1: i32) -> (i32, i32) {
    %c1_i32 = arith.constant 1 : i32
    %0 = arith.muli %arg0, %c1_i32 : i32
    %1 = arith.addi %0, %arg1 : i32
    %c0_i32 = arith.constant 0 : i32
    %2 = arith.minsi %1, %c0_i32 : i32
    %c0_i32_0 = arith.constant 0 : i32
    %c0_i32_1 = arith.constant 0 : i32
    return %2, %c0_i32_0 : i32, i32
  }
  func.func @transform_1(%arg0: i32, %arg1: i32) -> (i32, i32) {
    %c1_i32 = arith.constant 1 : i32
    %0 = arith.muli %arg0, %c1_i32 : i32
    %1 = arith.addi %0, %arg1 : i32
    %c0_i32 = arith.constant 0 : i32
    %2 = arith.minsi %1, %c0_i32 : i32
    %c0_i32_0 = arith.constant 0 : i32
    %c0_i32_1 = arith.constant 0 : i32
    return %2, %c0_i32_0 : i32, i32
  }
  func.func @transform_2(%arg0: i32, %arg1: i32) -> (i32, i32, i32) {
    %c0_i32 = arith.constant 0 : i32
    %c0_i32_0 = arith.constant 0 : i32
    %c0_i32_1 = arith.constant 0 : i32
    return %arg0, %c0_i32, %c0_i32_0 : i32, i32, i32
  }
}

</mosaic_0001>

<llo_original>
// kernel: tpu_custom_call.1
$region0: #{tpu_custom_call.1}
  #allocation0 [shape = 'u32[]', space=smem, size = 0x4, offset = 0x4, fixed_abs, tag = 'smem constant byte address 0x4 - core index']
  #allocation1 [shape = 'u32[72,128]{1,0:T(1,128)}', space=vmem, size = 0x9000, scoped, tag = 'internal scratch']
  #allocation2 [shape = 'f32[8,128]{1,0:T(8,128)}', space=vmem, size = 0x1000, scoped, tag = 'scratch operand']
  %s0 = inlined_call_operand.vmem [shape: f32[8,16], index: 0, kind: input, shape index: {}]
  %s1 = inlined_call_operand.vmem [shape: s32[8,1], index: 1, kind: input, shape index: {}]
  %s2 = inlined_call_operand.hbm [shape: f32[1,8,128], index: 2, kind: output, shape index: {}]
  %s3 = sld [smem:[#allocation0]]
  $region26: #{tpu_custom_call.1} parent=0
    _
  %s5 = ssub.s32 1, %s3
  %s6 = scalar_select 0, %s5, %s3
  $region1: #{tpu_custom_call.1} parent=0
    #allocation3 [shape = 'u8[4096]{0}', space=vmem, size = 0x1000, scoped, tag = 'output window, operand 0, single buffered']
    #allocation4 [shape = 's32[1]{0}', space=sflag, size = 0x4, scoped, tag = 'scoped memory for tpu_custom_call.1']
    %7 = vsyncpa [#allocation4], 0
    // Predicated region
    $region2: #{tpu_custom_call.1} parent=1 // pred_check
      _
    $region3: #{tpu_custom_call.1} parent=1 // pred_check_branch
      %9 = sbr.rel (0) target = $region5
    $region4: #{tpu_custom_call.1} parent=1 // pred_region
      %s10 = sadd.s32 0, 0
      %p11 = scmp.lt.s32.totalorder %s10, 0
      %s12 = scalar_select %p11, %s10, 0
      %p13 = scmp.lt.s32.totalorder %s12, 0
      %s14 = scalar_select %p13, %s12, 0
      %s15 = smul.addr %s14, 8
      %s16 = scalar_lea.vmem %s0, %s15
      %s17 = sadd.s32 0, 0
      %p18 = scmp.lt.s32.totalorder %s17, 0
      %s19 = scalar_select %p18, %s17, 0
    $region5: #{tpu_custom_call.1} parent=1 // pred_fallthru
      _
    // Predicated region
    $region6: #{tpu_custom_call.1} parent=1 // pred_check
      _
    $region7: #{tpu_custom_call.1} parent=1 // pred_check_branch
      %21 = sbr.rel (0) target = $region9
    $region8: #{tpu_custom_call.1} parent=1 // pred_region
      %s22 = sadd.s32 0, 0
      %p23 = scmp.lt.s32.totalorder %s22, 0
      %s24 = scalar_select %p23, %s22, 0
      %p25 = scmp.lt.s32.totalorder %s24, 0
      %s26 = scalar_select %p25, %s24, 0
      %s27 = smul.addr %s26, 8
      %s28 = scalar_lea.vmem %s1, %s27
      %s29 = sadd.s32 0, 0
      %p30 = scmp.lt.s32.totalorder %s29, 0
      %s31 = scalar_select %p30, %s29, 0
    $region9: #{tpu_custom_call.1} parent=1 // pred_fallthru
      _
    %s32 = sadd.s32 0, 0
    %p33 = scmp.lt.s32.totalorder %s32, 0
    %s34 = scalar_select %p33, %s32, 0
    %p35 = scmp.lt.s32.totalorder %s34, 0
    %s36 = scalar_select %p35, %s34, 0
    %s37 = smul.addr %s36, 8
    %s38 = scalar_lea.vmem %s0, %s37
    %s39 = sadd.s32 0, 0
    %p40 = scmp.lt.s32.totalorder %s39, 0
    %s41 = scalar_select %p40, %s39, 0
    %p42 = scmp.lt.s32.totalorder %s41, 0
    %s43 = scalar_select %p42, %s41, 0
    %s44 = smul.addr %s43, 8
    %s45 = scalar_lea.vmem %s1, %s44
    %s46 = sadd.s32 0, 0
    %p47 = scmp.lt.s32.totalorder %s46, 0
    %s48 = scalar_select %p47, %s46, 0
    %p49 = scmp.lt.s32.totalorder %s48, 0
    %s50 = scalar_select %p49, %s48, 0
    %s51 = smul.addr %s50, 8
    %s52 = scalar_lea.vmem %s0, %s51
    %s53 = sadd.s32 0, 0
    %p54 = scmp.lt.s32.totalorder %s53, 0
    %s55 = scalar_select %p54, %s53, 0
    %s56 = sadd.s32 0, 0
    %p57 = scmp.lt.s32.totalorder %s56, 0
    %s58 = scalar_select %p57, %s56, 0
    %p59 = scmp.lt.s32.totalorder %s58, 0
    %s60 = scalar_select %p59, %s58, 0
    %s61 = smul.addr %s60, 8
    %s62 = scalar_lea.vmem %s1, %s61
    %s63 = sadd.s32 0, 0
    %p64 = scmp.lt.s32.totalorder %s63, 0
    %s65 = scalar_select %p64, %s63, 0
    %p66 = scmp.eq.s32.totalorder 0, 0
    // Predicated region
    $region10: #{tpu_custom_call.1} parent=1 // pred_check
      %p67 = pneg %p66
    $region11: #{tpu_custom_call.1} parent=1 // pred_check_branch
      %69 = sbr.rel (%p67) target = $region13
    $region12: #{tpu_custom_call.1} parent=1 // pred_region
      %70 = vst [vmem:[#allocation2] sm:$0xff] 0.0
    $region13: #{tpu_custom_call.1} parent=1 // pred_fallthru
      _
    %v71 = vld [vmem:[%s52] sm:$0xff]
    %v72 = vld [vmem:[%s62] sm:$0xff]
    %s73 = sadd.s32 0, 0
    %s74 = smul.u32 %s73, 8
    %v75 = vlaneseq
    %v76 = vshrl.u32 %v75, 7
    %v77 = vstv %s74
    %v78 = vadd.s32 %v77, %v76
    %vm79 = vcmp.lt.s32.totalorder %v78, 8
    %v80 = vsel %vm79, 1, 0
    %vm81 = vcmp.eq.s32.totalorder %v80, 1
    %v82 = vsel %vm81, %v71, 0.0
    %vm83 = vcmask 130048
    %v84 = vsel %vm83, %v82, -inf
    %85 = vmax.xlane.f32.xlu0 %v84
    %v86 = vpop.xlane.xlu0 %85
    %v87 = vsub.f32 %v82, %v86
    %v88 = vmul.f32 %v87, 1.442695
    %v89 = vpow.pop %v88
    %v90 = vsel %vm83, %v89, 0.0
    %91 = vadd.xlane.f32.xlu0 %v90
    %v92 = vpop.xlane.xlu0 %91
    %v93 = vrcp.pop %v92
    %v94 = vmul.f32 %v92, %v93
    %v95 = vsub.f32 1.0, %v94
    %v96 = vmul.f32 %v93, %v95
    %v97 = vadd.f32 %v93, %v96
    %vm98 = vweird.f32 %v92
    %vm99 = vweird.f32 %v93
    %vm100 = vmor %vm98, %vm99
    %v101 = vsel %vm100, %v93, %v97
    %v102 = vand.u32 2147483647, %v92
    %vm103 = vcmp.eq.f32.partialorder %v102, 8.507059e+37
    %v104 = vand.u32 %v92, 2147483648
    %v105 = vor.u32 1.1754944e-38, %v104
    %v106 = vsel %vm103, %v105, %v101
    %v107 = vlaneseq
    %v108 = vand.u32 %v107, 127
    %vm109 = vcmp.eq.f32.partialorder %v82, %v86
    %v110 = vsel %vm109, %v108, 16
    %v111 = vsel %vm83, %v110, 2147483647
    %v112 = vand.u32 %v111, 65535
    %v113 = vshra.s32 %v111, 16
    %v114 = vcvt.s32.f32 %v112
    %v115 = vcvt.s32.f32 %v113
    %116 = vmin.xlane.f32.xlu0 %v115
    %v117 = vpop.xlane.xlu0 %116
    %vm118 = vcmp.eq.f32.partialorder %v115, %v117
    %v119 = vsel %vm118, %v114, inf
    %120 = vmin.xlane.f32.xlu0 %v119
    %v121 = vpop.xlane.xlu0 %120
    %v122 = vcvt.f32.s32 %v121
    %v123 = vcvt.f32.s32 %v117
    %v124 = vshll.u32 %v123, 16
    %v125 = vadd.s32 %v124, %v122
    %vm126 = vcmp.eq.s32.totalorder %v125, %v72
    %v127 = vsel %vm126, 1, 0
    %v128 = vcvt.s32.f32 %v127
    %v129 = vcvt.s32.f32 %v108
    %v130 = vadd.f32 %v129, 0.5
    %v131 = vmul.f32 %v130, 0.06666667
    %v132 = vsub.f32 %v106, %v131
    %v133 = vmul.f32 %v132, %v132
    %v134 = vmul.f32 %v133, -200.0
    %v135 = vmul.f32 %v134, 1.442695
    %v136 = vpow.pop %v135
    %vm137 = vcmp.lt.s32.totalorder %v108, 15
    %v138 = vsel %vm137, 1, 0
    %vm139 = vcmp.eq.s32.totalorder %v138, 1
    %v140 = vsel %vm139, %v136, 0.0
    %141 = vadd.xlane.f32.xlu0 %v140
    %v142 = vpop.xlane.xlu0 %141
    %v143 = vadd.f32 %v142, 1e-06
    %v144 = vrcp.pop %v143
    %v145 = vcvt.s32.f32 %v80
    %v146 = vmul.f32 %v144, %v145
    %v147 = vmul.f32 %v140, %v146
    %v148 = vld [vmem:[#allocation2] sm:$0x1]
    %v149 = vmul.f32 %v147, %v106
    %v150 = vrot.slane %v149, 4
    %v151 = vadd.f32 %v149, %v150
    %v152 = vrot.slane %v151, 2
    %v153 = vadd.f32 %v151, %v152
    %v154 = vrot.slane %v153, 1
    %v155 = vadd.f32 %v153, %v154
    %v156 = vadd.f32 %v148, %v155
    %157 = vst [vmem:[#allocation2] sm:$0x1] %v156
    %v158 = vld [vmem:[#allocation2 + $0x1] sm:$0x1]
    %v159 = vrot.slane %v147, 4
    %v160 = vadd.f32 %v147, %v159
    %v161 = vrot.slane %v160, 2
    %v162 = vadd.f32 %v160, %v161
    %v163 = vrot.slane %v162, 1
    %v164 = vadd.f32 %v162, %v163
    %v165 = vadd.f32 %v158, %v164
    %166 = vst [vmem:[#allocation2 + $0x1] sm:$0x1] %v165
    %v167 = vld [vmem:[#allocation2 + $0x2] sm:$0x1]
    %169 = vset.pattern.permute.xlu0 0
    %170 = vperm.xlu0 %169, %v128
    %v171 = vpop.permute.xlu0 %170
    %v173 = vmul.f32 %v147, %v171
    %v174 = vrot.slane %v173, 4
    %v175 = vadd.f32 %v173, %v174
    %v176 = vrot.slane %v175, 2
    %v177 = vadd.f32 %v175, %v176
    %v178 = vrot.slane %v177, 1
    %v179 = vadd.f32 %v177, %v178
    %v180 = vadd.f32 %v167, %v179
    %181 = vst [vmem:[#allocation2 + $0x2] sm:$0x1] %v180
    // Predicated region
    $region14: #{tpu_custom_call.1} parent=1 // pred_check
      %p182 = pneg %p66
    $region15: #{tpu_custom_call.1} parent=1 // pred_check_branch
      %184 = sbr.rel (%p182) target = $region17
    $region16: #{tpu_custom_call.1} parent=1 // pred_region
      %v185 = vld [vmem:[#allocation2] sm:$0xff]
      %186 = vst [vmem:[#allocation3] sm:$0xff] %v185
    $region17: #{tpu_custom_call.1} parent=1 // pred_fallthru
      _
    // Predicated region
    $region18: #{tpu_custom_call.1} parent=1 // pred_check
      _
    $region19: #{tpu_custom_call.1} parent=1 // pred_check_branch
      %188 = sbr.rel (0) target = $region21
    $region20: #{tpu_custom_call.1} parent=1 // pred_region
      %190 = vsyncadd [#allocation4], 0
      %s192 = sshll.u32 [#allocation3], 4
      %s193 = int_to_ptr.vmem [resolvable:$true] %s192
      %s194 = sshll.u32 %s2, 4
      %s195 = int_to_ptr.hbm [resolvable:$true] %s194
      %197 = dma.vmem_to_hbm [thread:$0]  %s193, 128, %s195, [#allocation4]
    $region21: #{tpu_custom_call.1} parent=1 // pred_fallthru
      _
    // Predicated region
    $region22: #{tpu_custom_call.1} parent=1 // pred_check
      _
    $region23: #{tpu_custom_call.1} parent=1 // pred_check_branch
      %199 = sbr.rel (0) target = $region25
    $region24: #{tpu_custom_call.1} parent=1 // pred_region
      %201 = dma.done [#allocation4], 128
    $region25: #{tpu_custom_call.1} parent=1 // pred_fallthru
      _
    %202 = vsyncpa [#allocation4], 1

</llo_original>
